<compile_context>
chip_gen: v6e
topology: v6e:2x2x1
jax: 0.10.0
libtpu: 0.0.40
codegen_flags: <defaults>
</compile_context>

<pallas_src>
import functools

import jax
import jax.numpy as jnp
from jax import lax
from jax.experimental import pallas as pl
from jax.experimental.pallas import tpu as pltpu

EPS = 1e-5
LANE = 128


def _round_up(x, m):
    return (x + m - 1) // m * m


def _pad2d(a, shape):
    out = jnp.zeros(shape, jnp.float32)
    return out.at[: a.shape[0], : a.shape[1]].set(a.astype(jnp.float32))


def _pad1d(a, n):
    return jnp.zeros((n,), jnp.float32).at[: a.shape[0]].set(a.astype(jnp.float32))


@functools.lru_cache(maxsize=None)
def _vmem_limit_bytes():
    """Per-generation scoped-VMEM budget (derive, don't hardcode 32 MiB)."""
    try:
        cap = int(pltpu.get_tpu_info().vmem_capacity_bytes)
        return int(max(32 << 20, min(int(0.75 * cap), 96 << 20)))
    except Exception:  # pragma: no cover - conservative fallback
        return 32 << 20


@functools.lru_cache(maxsize=None)
def _roll_fwd_is_positive():
    """True if pltpu.roll(x, +1, axis) moves data toward HIGHER indices
    (np.roll convention). Probed once on-device so conv2's shifted taps are
    orientation-proof."""
    def k(x_ref, o_ref):
        o_ref[...] = pltpu.roll(x_ref[...], 1, axis=0)

    x = lax.broadcasted_iota(jnp.float32, (8, LANE), 0)
    y = pl.pallas_call(k, out_shape=jax.ShapeDtypeStruct((8, LANE), jnp.float32))(x)
    return float(jax.device_get(y)[0, 0]) == 7.0


def _bn_scale_bias(ch_sum, ch_sumsq, count, gamma, beta):
    """Fold per-channel sum / sumsq into a fused (scale, bias) pair (f32)."""
    mean = ch_sum / count
    var = jnp.maximum(ch_sumsq / count - mean * mean, 0.0)
    inv = lax.rsqrt(var + EPS)
    scale = gamma * inv
    bias = beta - mean * scale
    return scale.reshape(1, -1), bias.reshape(1, -1)


def _pick_row_tile(M, row_tile):
    """Largest 8-aligned tile <= row_tile that divides M (avoids re-pad passes)."""
    t = min(row_tile, M)
    t -= t % 8
    t = max(t, 8)
    tt = t
    while tt >= 8:
        if M % tt == 0:
            return tt, M
        tt -= 8
    return t, _round_up(M, t)


# -----------------------------------------------------------------------------
# Stage kernel: [optional BN-apply + ReLU prologue] -> 1x1 conv matmul -> stats
# -----------------------------------------------------------------------------
def _matmul_stats(x2d, scale, bias, w, *, apply_bn_relu, rows_valid, tm,
                  compute_dtype, out_dtype):
    Mp, K = x2d.shape
    Nc = w.shape[1]
    grid = Mp // tm
    mask_rows = rows_valid < Mp  # static: only generated if rows were padded
    x_item = jnp.dtype(x2d.dtype).itemsize
    o_item = jnp.dtype(out_dtype).itemsize

    def kernel(x_ref, s_ref, b_ref, w_ref, y_ref, ssum_ref, ssq_ref):
        h = x_ref[...].astype(jnp.float32)                  # bf16/f32 -> f32
        if apply_bn_relu:
            h = jnp.maximum(h * s_ref[...] + b_ref[...], 0.0)
        if mask_rows:
            # Must stay AFTER the prologue: relu(bias) on padded rows != 0.
            r = pl.program_id(0) * tm + lax.broadcasted_iota(
                jnp.int32, (tm, 1), 0)
            h = jnp.where(r < rows_valid, h, 0.0)
        y = jnp.dot(h.astype(compute_dtype), w_ref[...],
                    preferred_element_type=jnp.float32)     # bf16 MXU, f32 acc
        yq = y.astype(out_dtype)
        y_ref[...] = yq                                      # bf16 storage
        yf = yq.astype(jnp.float32)                          # stats of stored vals
        ssum_ref[...] = jnp.sum(yf, axis=0, keepdims=True).reshape(1, 1, Nc)
        ssq_ref[...] = jnp.sum(yf * yf, axis=0, keepdims=True).reshape(1, 1, Nc)

    cost = pl.CostEstimate(
        flops=int(2 * Mp * K * Nc),
        transcendentals=0,
        bytes_accessed=int(Mp * K * x_item + K * Nc * 2 + Mp * Nc * o_item
                           + grid * 2 * Nc * 4 + 2 * K * 4))

    y, ssum, ssq = pl.pallas_call(
        kernel,
        out_shape=(jax.ShapeDtypeStruct((Mp, Nc), out_dtype),
                   jax.ShapeDtypeStruct((grid, 1, Nc), jnp.float32),
                   jax.ShapeDtypeStruct((grid, 1, Nc), jnp.float32)),
        grid=(grid,),
        in_specs=[pl.BlockSpec((tm, K), lambda i: (i, 0)),
                  pl.BlockSpec((1, K), lambda i: (0, 0)),     # resident
                  pl.BlockSpec((1, K), lambda i: (0, 0)),     # resident
                  pl.BlockSpec((K, Nc), lambda i: (0, 0))],   # resident weight
        out_specs=(pl.BlockSpec((tm, Nc), lambda i: (i, 0)),
                   pl.BlockSpec((1, 1, Nc), lambda i: (i, 0, 0)),
                   pl.BlockSpec((1, 1, Nc), lambda i: (i, 0, 0))),
        compiler_params=pltpu.CompilerParams(
            dimension_semantics=("parallel",),
            vmem_limit_bytes=_vmem_limit_bytes()),
        cost_estimate=cost,
    )(x2d, scale, bias, w)
    return y, ssum.sum(axis=(0, 1)), ssq.sum(axis=(0, 1))


# -----------------------------------------------------------------------------
# Stage kernel: BN1-apply + ReLU -> 3x3 conv (roll-shifted taps, K=3C matmuls)
# -----------------------------------------------------------------------------
def _conv3x3_stats(y1_img, scale, bias, w2cat, *, N, H, W, compute_dtype,
                   out_dtype):
    C = y1_img.shape[-1]
    Wp = W + 8  # 8 trailing zero columns: sublanes stay 8-aligned and the
                # +/-1 roll shifts wrap zeros in (no masking needed).
    if _roll_fwd_is_positive():
        sh_fwd, sh_bwd = 1, Wp - 1       # fwd roll: out[x] = in[x-1]
    else:
        sh_fwd, sh_bwd = Wp - 1, 1
    in_item = jnp.dtype(y1_img.dtype).itemsize
    o_item = jnp.dtype(out_dtype).itemsize

    def kernel(y_ref, s_ref, b_ref, w_ref, y2_ref, ssum_ref, ssq_ref, hpad_ref):
        s = s_ref[...].reshape(1, 1, C)
        b = b_ref[...].reshape(1, 1, C)
        h = jnp.maximum(y_ref[0].astype(jnp.float32) * s + b, 0.0)  # (H, W, C)
        # Only the border strips are rewritten each image (no full-scratch
        # zero); every store is sublane-aligned (column offsets 0 / W).
        # Borders are rewritten every step (not pl.when(pid==0)) so the kernel
        # stays correct under megacore sharding of the parallel grid axis.
        zrow = jnp.zeros((1, Wp, C), jnp.float32)
        hpad_ref[0:1, :, :] = zrow
        hpad_ref[H + 1:H + 2, :, :] = zrow
        hpad_ref[1:H + 1, W:Wp, :] = jnp.zeros((H, Wp - W, C), jnp.float32)
        hpad_ref[1:H + 1, 0:W, :] = h
        acc = jnp.zeros((H * W, C), jnp.float32)
        for dy in range(3):
            row = hpad_ref[dy:dy + H, :, :]                      # (H, Wp, C)
            left = pltpu.roll(row, sh_fwd, axis=1)[:, 0:W, :]    # in[.., x-1]
            center = row[:, 0:W, :]
            right = pltpu.roll(row, sh_bwd, axis=1)[:, 0:W, :]   # in[.., x+1]
            tap = jnp.concatenate([left, center, right], axis=-1)  # (H, W, 3C)
            acc = acc + jnp.dot(
                tap.reshape(H * W, 3 * C).astype(compute_dtype), w_ref[dy],
                preferred_element_type=jnp.float32)
        yq = acc.astype(out_dtype)
        y2_ref[...] = yq
        yf = yq.astype(jnp.float32)
        ssum_ref[...] = jnp.sum(yf, axis=0, keepdims=True).reshape(1, 1, C)
        ssq_ref[...] = jnp.sum(yf * yf, axis=0, keepdims=True).reshape(1, 1, C)

    cost = pl.CostEstimate(
        flops=int(18 * N * H * W * C * C),
        transcendentals=0,
        bytes_accessed=int(N * H * W * C * (in_item + o_item) + 9 * C * C * 2
                           + N * 2 * C * 4))

    y2, ssum, ssq = pl.pallas_call(
        kernel,
        out_shape=(jax.ShapeDtypeStruct((N * H * W, C), out_dtype),
                   jax.ShapeDtypeStruct((N, 1, C), jnp.float32),
                   jax.ShapeDtypeStruct((N, 1, C), jnp.float32)),
        grid=(N,),
        in_specs=[pl.BlockSpec((1, H, W, C), lambda n: (n, 0, 0, 0)),
                  pl.BlockSpec((1, C), lambda n: (0, 0)),          # resident
                  pl.BlockSpec((1, C), lambda n: (0, 0)),          # resident
                  pl.BlockSpec((3, 3 * C, C), lambda n: (0, 0, 0))],
        out_specs=(pl.BlockSpec((H * W, C), lambda n: (n, 0)),
                   pl.BlockSpec((1, 1, C), lambda n: (n, 0, 0)),
                   pl.BlockSpec((1, 1, C), lambda n: (n, 0, 0))),
        # f32 halo scratch (VMEM-only; for very large H*W*C strip-tile and/or
        # use a bf16 scratch to fit v7x's 64 MiB VMEM).
        scratch_shapes=[pltpu.VMEM((H + 2, Wp, C), jnp.float32)],
        compiler_params=pltpu.CompilerParams(
            dimension_semantics=("parallel",),
            vmem_limit_bytes=_vmem_limit_bytes()),
        cost_estimate=cost,
    )(y1_img, scale, bias, w2cat)
    return y2, ssum.sum(axis=(0, 1)), ssq.sum(axis=(0, 1))


# -----------------------------------------------------------------------------
# Final stage: BN3-apply + residual add + ReLU (tiled elementwise, f32)
# -----------------------------------------------------------------------------
def _bn_residual_relu(y3, scale, bias, residual, *, tm):
    Mp, C = y3.shape
    grid = Mp // tm

    def kernel(y_ref, s_ref, b_ref, r_ref, o_ref):
        o_ref[...] = jnp.maximum(
            y_ref[...].astype(jnp.float32) * s_ref[...] + b_ref[...]
            + r_ref[...], 0.0)

    cost = pl.CostEstimate(
        flops=int(3 * Mp * C),
        transcendentals=0,
        bytes_accessed=int(Mp * C * (jnp.dtype(y3.dtype).itemsize + 4 + 4)))

    return pl.pallas_call(
        kernel,
        out_shape=jax.ShapeDtypeStruct((Mp, C), jnp.float32),
        grid=(grid,),
        in_specs=[pl.BlockSpec((tm, C), lambda i: (i, 0)),
                  pl.BlockSpec((1, C), lambda i: (0, 0)),
                  pl.BlockSpec((1, C), lambda i: (0, 0)),
                  pl.BlockSpec((tm, C), lambda i: (i, 0))],
        out_specs=pl.BlockSpec((tm, C), lambda i: (i, 0)),
        compiler_params=pltpu.CompilerParams(
            dimension_semantics=("parallel",),
            vmem_limit_bytes=_vmem_limit_bytes()),
        cost_estimate=cost,
    )(y3, scale, bias, residual)


# -----------------------------------------------------------------------------
# Full Bottleneck forward
# -----------------------------------------------------------------------------
def bottleneck_forward(x_nchw, params, stride=1, row_tile=1024,
                       compute_dtype=jnp.bfloat16, act_dtype=jnp.bfloat16):
    # TODO(synk): stride>1 and the arbitrary `downsample` nn.Module path are not implemented.
    assert stride == 1, "only stride=1 / downsample=None supported"
    N, Cin, H, W = x_nchw.shape
    P = params["w1"].shape[1]
    C4 = 4 * P
    assert Cin == C4, "identity residual requires inplanes == 4*planes"
    assert W % 8 == 0 and (H * W) % 8 == 0, "demo kernel assumes 8-aligned W"

    Cin_p = _round_up(Cin, LANE)
    Pp = _round_up(P, LANE)
    C4p = _round_up(C4, LANE)

    M = N * H * W
    tm, Mp = _pick_row_tile(M, row_tile)

    # ---- layout prep: NHWC rows, channels padded to lane-dense 128 multiples.
    # (When this block is embedded in a network, keep the NHWC/padded layout
    #  end-to-end instead of paying these transposes per block.)
    x_nhwc = jnp.transpose(x_nchw, (0, 2, 3, 1)).astype(jnp.float32)
    x2d = _pad2d(x_nhwc.reshape(M, Cin), (Mp, Cin_p))       # f32 (also residual)

    w1 = _pad2d(params["w1"], (Cin_p, Pp)).astype(compute_dtype)
    w2p = jnp.zeros((3, 3, Pp, Pp), jnp.float32).at[:, :, :P, :P].set(
        params["w2_hwio"].astype(jnp.float32))
    w2cat = w2p.reshape(3, 3 * Pp, Pp).astype(compute_dtype)  # (dy, dx*Cin, Cout)
    w3 = _pad2d(params["w3"], (Pp, C4p)).astype(compute_dtype)

    g1, b1 = _pad1d(params["g1"], Pp), _pad1d(params["b1"], Pp)
    g2, b2 = _pad1d(params["g2"], Pp), _pad1d(params["b2"], Pp)
    g3, b3 = _pad1d(params["g3"], C4p), _pad1d(params["b3"], C4p)

    dummy = jnp.zeros((1, Cin_p), jnp.float32)  # unused prologue (stage 1)

    # ---- stage 1: conv1 (1x1) + per-channel stats -> bf16 y1 ----
    y1, s1, ss1 = _matmul_stats(x2d, dummy, dummy, w1,
                                apply_bn_relu=False, rows_valid=M, tm=tm,
                                compute_dtype=compute_dtype, out_dtype=act_dtype)
    sc1, bi1 = _bn_scale_bias(s1, ss1, M, g1, b1)

    # ---- stage 2: bn1+relu prologue, 3x3 conv via roll-shifted in-VMEM taps --
    y2, s2, ss2 = _conv3x3_stats(y1[:M].reshape(N, H, W, Pp), sc1, bi1, w2cat,
                                 N=N, H=H, W=W, compute_dtype=compute_dtype,
                                 out_dtype=act_dtype)
    sc2, bi2 = _bn_scale_bias(s2, ss2, M, g2, b2)

    # ---- stage 3: bn2+relu prologue, conv3 (1x1) + stats -> bf16 y3 ----
    y2p = y2 if Mp == M else jnp.zeros((Mp, Pp), act_dtype).at[:M].set(y2)
    y3, s3, ss3 = _matmul_stats(y2p, sc2, bi2, w3,
                                apply_bn_relu=True, rows_valid=M, tm=tm,
                                compute_dtype=compute_dtype, out_dtype=act_dtype)
    sc3, bi3 = _bn_scale_bias(s3, ss3, M, g3, b3)

    # ---- stage 4: bn3 + identity residual + relu (f32 output) ----
    out_p = _bn_residual_relu(y3, sc3, bi3, x2d, tm=tm)

    out = out_p[:M, :C4].reshape(N, H, W, C4)
    return jnp.transpose(out, (0, 3, 1, 2))


# -----------------------------------------------------------------------------
# Pure-JAX reference with the identical mixed-precision policy (bf16 MXU
# operands, f32 accumulation, bf16 inter-stage storage, f32 BN/ReLU/residual).
# -----------------------------------------------------------------------------
def bottleneck_ref(x_nchw, params, compute_dtype=jnp.bfloat16,
                   act_dtype=jnp.bfloat16):
    cd = compute_dtype
    x = jnp.transpose(x_nchw, (0, 2, 3, 1)).astype(jnp.float32)

    def bn(y, g, b):
        mean = y.mean(axis=(0, 1, 2), keepdims=True)
        var = ((y - mean) ** 2).mean(axis=(0, 1, 2), keepdims=True)
        return (y - mean) * lax.rsqrt(var + EPS) * g.reshape(1, 1, 1, -1) \
            + b.reshape(1, 1, 1, -1)

    def q(y):  # same bf16 inter-stage storage rounding as the kernels
        return y.astype(act_dtype).astype(jnp.float32)

    y1 = q(jnp.einsum("nhwc,co->nhwo", x.astype(cd), params["w1"].astype(cd),
                      preferred_element_type=jnp.float32))
    h1 = jax.nn.relu(bn(y1, params["g1"], params["b1"]))
    y2 = q(lax.conv_general_dilated(h1.astype(cd), params["w2_hwio"].astype(cd),
                                    (1, 1), "SAME",
                                    dimension_numbers=("NHWC", "HWIO", "NHWC"),
                                    preferred_element_type=jnp.float32))
    h2 = jax.nn.relu(bn(y2, params["g2"], params["b2"]))
    y3 = q(jnp.einsum("nhwc,co->nhwo", h2.astype(cd), params["w3"].astype(cd),
                      preferred_element_type=jnp.float32))
    out = jax.nn.relu(bn(y3, params["g3"], params["b3"]) + x)
    return jnp.transpose(out, (0, 3, 1, 2))


if __name__ == "__main__":
    # Small shapes consistent with the module: planes=8, inplanes=4*planes=32
    # so the identity residual (downsample=None) is shape-compatible.
    N, H, W = 2, 8, 8
    planes = 8
    inplanes = planes * 4

    key = jax.random.PRNGKey(0)
    kx, k1, k2, k3, k4 = jax.random.split(key, 5)
    kg1, kb1, kg2, kb2, kg3, kb3 = jax.random.split(k4, 6)

    params = {
        # conv weights stored channels-last friendly: (Cin, Cout) / HWIO.
        "w1": jax.random.normal(k1, (inplanes, planes), jnp.float32) * 0.1,
        "w2_hwio": jax.random.normal(k2, (3, 3, planes, planes), jnp.float32) * 0.1,
        "w3": jax.random.normal(k3, (planes, planes * 4), jnp.float32) * 0.1,
        # non-trivial BN affine params to exercise the fused scale/bias path.
        "g1": 1.0 + 0.2 * jax.random.normal(kg1, (planes,), jnp.float32),
        "b1": 0.2 * jax.random.normal(kb1, (planes,), jnp.float32),
        "g2": 1.0 + 0.2 * jax.random.normal(kg2, (planes,), jnp.float32),
        "b2": 0.2 * jax.random.normal(kb2, (planes,), jnp.float32),
        "g3": 1.0 + 0.2 * jax.random.normal(kg3, (planes * 4,), jnp.float32),
        "b3": 0.2 * jax.random.normal(kb3, (planes * 4,), jnp.float32),
    }

    x = jax.random.normal(kx, (N, inplanes, H, W), jnp.float32)

    # row_tile=64 -> 2 row tiles, so the per-tile stats reduction and the tiled
    # grids are actually exercised at this toy size (default is 1024).
    out = bottleneck_forward(x, params, row_tile=64)
    out = jax.block_until_ready(out)

    ref = bottleneck_ref(x, params)
    assert out.shape == (N, inplanes, H, W), out.shape
    max_err = float(jnp.max(jnp.abs(out - ref)))
    if max_err > 7.5e-3:
        raise AssertionError(f"Pallas vs reference mismatch: max abs err {max_err}")

    print("KERNEL_OK")
</pallas_src>

<mosaic_0001>
module attributes {stable_mosaic.version = 11 : i64} {
  func.func @kernel(%arg0: i32, %arg1: memref<64x128xf32, #tpu.memory_space<vmem>>, %arg2: memref<1x128xf32, #tpu.memory_space<vmem>>, %arg3: memref<1x128xf32, #tpu.memory_space<vmem>>, %arg4: memref<128x128xbf16, #tpu.memory_space<vmem>>, %arg5: memref<64x128xbf16, #tpu.memory_space<vmem>>, %arg6: memref<1x1x128xf32, #tpu.memory_space<vmem>>, %arg7: memref<1x1x128xf32, #tpu.memory_space<vmem>>) attributes {dimension_semantics = [#tpu.dimension_semantics<parallel>], iteration_bounds = array<i64: 2>, scalar_prefetch = 0 : i64, scratch_operands = 0 : i64, tpu.core_type = #tpu.core_type<tc>, window_params = [{transform_indices = @transform_0, window_bounds = array<i64: 64, 128>}, {pipeline_mode = #tpu.pipeline_mode<synchronous>, transform_indices = @transform_1, window_bounds = array<i64: 1, 128>}, {pipeline_mode = #tpu.pipeline_mode<synchronous>, transform_indices = @transform_2, window_bounds = array<i64: 1, 128>}, {pipeline_mode = #tpu.pipeline_mode<synchronous>, transform_indices = @transform_3, window_bounds = array<i64: 128, 128>}, {transform_indices = @transform_4, window_bounds = array<i64: 64, 128>}, {transform_indices = @transform_5, window_bounds = array<i64: 1, 1, 128>}, {transform_indices = @transform_6, window_bounds = array<i64: 1, 1, 128>}]} {
    %c0 = arith.constant 0 : index
    %c0_0 = arith.constant 0 : index
    %0 = vector.load %arg1[%c0, %c0_0] : memref<64x128xf32, #tpu.memory_space<vmem>>, vector<64x128xf32>
    %1 = arith.truncf %0 : vector<64x128xf32> to vector<64x128xbf16>
    %c0_1 = arith.constant 0 : index
    %c0_2 = arith.constant 0 : index
    %2 = vector.load %arg4[%c0_1, %c0_2] : memref<128x128xbf16, #tpu.memory_space<vmem>>, vector<128x128xbf16>
    %cst = arith.constant dense<0.000000e+00> : vector<64x128xf32>
    %3 = tpu.matmul %1, %2, %cst {dimension_numbers = #tpu.dot_dimension_numbers<[1], [0], [0], [1], [0, 0, 1, 1], [], []>} : vector<64x128xbf16>, vector<128x128xbf16>, vector<64x128xf32> -> vector<64x128xf32>
    %4 = arith.truncf %3 : vector<64x128xf32> to vector<64x128xbf16>
    %c0_3 = arith.constant 0 : index
    %c0_4 = arith.constant 0 : index
    %5 = vector.load %arg5[%c0_3, %c0_4] : memref<64x128xbf16, #tpu.memory_space<vmem>>, vector<64x128xbf16>
    tpu.vector_store %arg5[%c0_3, %c0_4], %4 {strides = array<i32>} : memref<64x128xbf16, #tpu.memory_space<vmem>>, vector<64x128xbf16>,
    %6 = arith.extf %4 : vector<64x128xbf16> to vector<64x128xf32>
    %cst_5 = arith.constant dense<0.000000e+00> : vector<128xf32>
    %7 = vector.multi_reduction <add>, %6, %cst_5 [0] : vector<64x128xf32> to vector<128xf32>
    %8 = vector.shape_cast %7 : vector<128xf32> to vector<1x128xf32>
    %9 = vector.shape_cast %8 : vector<1x128xf32> to vector<1x1x128xf32>
    %c0_6 = arith.constant 0 : index
    %c0_7 = arith.constant 0 : index
    %c0_8 = arith.constant 0 : index
    %10 = vector.load %arg6[%c0_6, %c0_7, %c0_8] : memref<1x1x128xf32, #tpu.memory_space<vmem>>, vector<1x1x128xf32>
    tpu.vector_store %arg6[%c0_6, %c0_7, %c0_8], %9 {strides = array<i32>} : memref<1x1x128xf32, #tpu.memory_space<vmem>>, vector<1x1x128xf32>,
    %11 = arith.mulf %6, %6 : vector<64x128xf32>
    %cst_9 = arith.constant dense<0.000000e+00> : vector<128xf32>
    %12 = vector.multi_reduction <add>, %11, %cst_9 [0] : vector<64x128xf32> to vector<128xf32>
    %13 = vector.shape_cast %12 : vector<128xf32> to vector<1x128xf32>
    %14 = vector.shape_cast %13 : vector<1x128xf32> to vector<1x1x128xf32>
    %c0_10 = arith.constant 0 : index
    %c0_11 = arith.constant 0 : index
    %c0_12 = arith.constant 0 : index
    %15 = vector.load %arg7[%c0_10, %c0_11, %c0_12] : memref<1x1x128xf32, #tpu.memory_space<vmem>>, vector<1x1x128xf32>
    tpu.vector_store %arg7[%c0_10, %c0_11, %c0_12], %14 {strides = array<i32>} : memref<1x1x128xf32, #tpu.memory_space<vmem>>, vector<1x1x128xf32>,
    return
  }
  func.func @transform_0(%arg0: i32) -> (i32, i32) {
    %c0_i32 = arith.constant 0 : i32
    %c0_i32_0 = arith.constant 0 : i32
    return %arg0, %c0_i32 : i32, i32
  }
  func.func @transform_1(%arg0: i32) -> (i32, i32) {
    %c0_i32 = arith.constant 0 : i32
    %c0_i32_0 = arith.constant 0 : i32
    %c0_i32_1 = arith.constant 0 : i32
    return %c0_i32, %c0_i32_0 : i32, i32
  }
  func.func @transform_2(%arg0: i32) -> (i32, i32) {
    %c0_i32 = arith.constant 0 : i32
    %c0_i32_0 = arith.constant 0 : i32
    %c0_i32_1 = arith.constant 0 : i32
    return %c0_i32, %c0_i32_0 : i32, i32
  }
  func.func @transform_3(%arg0: i32) -> (i32, i32) {
    %c0_i32 = arith.constant 0 : i32
    %c0_i32_0 = arith.constant 0 : i32
    %c0_i32_1 = arith.constant 0 : i32
    return %c0_i32, %c0_i32_0 : i32, i32
  }
  func.func @transform_4(%arg0: i32) -> (i32, i32) {
    %c0_i32 = arith.constant 0 : i32
    %c0_i32_0 = arith.constant 0 : i32
    return %arg0, %c0_i32 : i32, i32
  }
  func.func @transform_5(%arg0: i32) -> (i32, i32, i32) {
    %c0_i32 = arith.constant 0 : i32
    %c0_i32_0 = arith.constant 0 : i32
    %c0_i32_1 = arith.constant 0 : i32
    return %arg0, %c0_i32, %c0_i32_0 : i32, i32, i32
  }
  func.func @transform_6(%arg0: i32) -> (i32, i32, i32) {
    %c0_i32 = arith.constant 0 : i32
    %c0_i32_0 = arith.constant 0 : i32
    %c0_i32_1 = arith.constant 0 : i32
    return %arg0, %c0_i32, %c0_i32_0 : i32, i32, i32
  }
}

</mosaic_0001>

<llo_original>
// kernel: tpu_custom_call.1
$region0: #{tpu_custom_call.1}
  #allocation0 [shape = 'u32[]', space=smem, size = 0x4, offset = 0x4, fixed_abs, tag = 'smem constant byte address 0x4 - core index']
  #allocation1 [shape = 'u32[144,128]{1,0:T(1,128)}', space=vmem, size = 0x12000, scoped, tag = 'internal scratch']
  %s0 = inlined_call_operand.hbm [shape: f32[128,128], index: 0, kind: input, shape index: {}]
  %s1 = inlined_call_operand.vmem [shape: f32[1,128], index: 1, kind: input, shape index: {}]
  %s2 = inlined_call_operand.vmem [shape: f32[1,128], index: 2, kind: input, shape index: {}]
  %s3 = inlined_call_operand.hbm [shape: bf16[128,128], index: 3, kind: input, shape index: {}]
  %s4 = inlined_call_operand.hbm [shape: bf16[128,128], index: 4, kind: output, shape index: {0}]
  %s5 = inlined_call_operand.hbm [shape: f32[2,1,128], index: 5, kind: output, shape index: {1}]
  %s6 = inlined_call_operand.hbm [shape: f32[2,1,128], index: 6, kind: output, shape index: {2}]
  %7 = xla_tuple %s4, %s5, %s6
  %s8 = sld [smem:[#allocation0]]
  $region73: #{tpu_custom_call.1} parent=0
    _
  %s10 = ssub.s32 1, %s8
  %s11 = scalar_select 0, %s10, %s8
  $region1: #{tpu_custom_call.1} parent=0
    #allocation2 [shape = 'u8[65536]{0}', space=vmem, size = 0x10000, scoped, tag = 'input window, operand 0']
    #allocation3 [shape = 's32[2]{0}', space=sflag, size = 0x8, scoped, tag = 'scoped memory for tpu_custom_call.1']
    #allocation4 [shape = 's32[2]{0}', space=sflag, size = 0x8, scoped, tag = 'scoped memory for tpu_custom_call.1']
    #allocation5 [shape = 'u8[32768]{0}', space=vmem, size = 0x8000, scoped, tag = 'input window, operand 3, single buffered']
    #allocation6 [shape = 's32[1]{0}', space=sflag, size = 0x4, scoped, tag = 'scoped memory for tpu_custom_call.1']
    #allocation7 [shape = 'u8[32768]{0}', space=vmem, size = 0x8000, scoped, tag = 'output window, operand 0']
    #allocation8 [shape = 'u8[1024]{0}', space=vmem, size = 0x400, scoped, tag = 'output window, operand 1']
    #allocation9 [shape = 's32[2]{0}', space=sflag, size = 0x8, scoped, tag = 'scoped memory for tpu_custom_call.1']
    #allocation10 [shape = 'u8[1024]{0}', space=vmem, size = 0x400, scoped, tag = 'output window, operand 2']
    %12 = vsyncpa [#allocation3], 0
    %s13 = scalar_lea.sflag [#allocation3], 1
    %14 = vsyncpa %s13, 0
    %15 = vsyncpa [#allocation6], 0
    %16 = vsyncpa [#allocation4], 0
    %s17 = scalar_lea.sflag [#allocation4], 1
    %18 = vsyncpa %s17, 0
    %19 = vsyncpa [#allocation9], 0
    %s20 = scalar_lea.sflag [#allocation9], 1
    %21 = vsyncpa %s20, 0
    loop: start=0, step=1, limit=4
    $region2: #{tpu_custom_call.1} parent=1 // loop_pre_header
      _
    $region3: #{tpu_custom_call.1} parent=1 // loop_header
      %s23 = sphi 0, %s27
      %p24 = scmp.ge.s32.totalorder %s23, 4
      %s33 = sphi 0, %s35
      %s36 = sphi 0, %s33
      %s37 = sphi 0, %s36
      %s53 = sphi 0, %s37
      %s57 = sphi 0, %s57
      %s59 = sphi 0, %s57
      %s60 = sphi 0, %s59
      %s74 = sphi 0, %s60
      %s78 = sphi 0, %s78
      %s80 = sphi 0, %s78
      %s81 = sphi 0, %s80
      %s95 = sphi 0, %s81
      %s99 = sphi 0, %s99
      %s101 = sphi 0, %s99
      %s102 = sphi 0, %s101
      %s116 = sphi 0, %s102
      %s122 = sphi 0, %s124
      %s125 = sphi 0, %s122
      %s126 = sphi 0, %s125
      %s142 = sphi 0, %s126
      %s148 = sphi 0, %s150
      %s151 = sphi 0, %s148
      %s152 = sphi 0, %s151
      %s168 = sphi 0, %s152
      %s174 = sphi 0, %s176
      %s177 = sphi 0, %s174
      %s178 = sphi 0, %s177
      %s194 = sphi 0, %s178
    $region4: #{tpu_custom_call.1} parent=1 // loop_header_branch
      %26 = sbr.rel (%p24) target = $region8
    $region5: #{tpu_custom_call.1} parent=1 // loop_body
      %s28 = ssub.s32 %s23, 1
      %s29 = ssub.s32 %s23, 2
      %s30 = sadd.s32 %s23, 1
      %s31 = ssub.s32 %s23, %s30
      %p32 = scmp.eq.s32.totalorder %s31, 0
      %s34 = sadd.s32 %s33, 1
      %s35 = scalar_select %p32, %s33, %s34
      %p38 = pneg %p32
      %p39 = scmp.eq.s32.totalorder %s23, 1
      %p40 = por %p38, %p39
      %p41 = scmp.ne.s32.totalorder %s33, %s36
      %p42 = scmp.eq.s32.totalorder %s23, 0
      %p43 = por %p41, %p42
      %p44 = scmp.ne.s32.totalorder %s33, %s36
      %p45 = scmp.eq.s32.totalorder %s28, 1
      %p46 = por %p44, %p45
      %p47 = scmp.ne.s32.totalorder %s36, %s37
      %p48 = scmp.eq.s32.totalorder %s28, 0
      %p49 = por %p47, %p48
      %p50 = scmp.ne.s32.totalorder %s36, %s37
      %p51 = scmp.eq.s32.totalorder %s29, 1
      %p52 = por %p50, %p51
      %p54 = scmp.ne.s32.totalorder %s37, %s53
      %p55 = scmp.eq.s32.totalorder %s29, 0
      %p56 = por %p54, %p55
      %s58 = sadd.s32 %s57, 1
      %p61 = scmp.eq.s32.totalorder %s23, 1
      %p62 = scmp.ne.s32.totalorder %s57, %s59
      %p63 = scmp.eq.s32.totalorder %s23, 0
      %p64 = por %p62, %p63
      %p65 = scmp.ne.s32.totalorder %s57, %s59
      %p66 = scmp.eq.s32.totalorder %s28, 1
      %p67 = por %p65, %p66
      %p68 = scmp.ne.s32.totalorder %s59, %s60
      %p69 = scmp.eq.s32.totalorder %s28, 0
      %p70 = por %p68, %p69
      %p71 = scmp.ne.s32.totalorder %s59, %s60
      %p72 = scmp.eq.s32.totalorder %s29, 1
      %p73 = por %p71, %p72
      %p75 = scmp.ne.s32.totalorder %s60, %s74
      %p76 = scmp.eq.s32.totalorder %s29, 0
      %p77 = por %p75, %p76
      %s79 = sadd.s32 %s78, 1
      %p82 = scmp.eq.s32.totalorder %s23, 1
      %p83 = scmp.ne.s32.totalorder %s78, %s80
      %p84 = scmp.eq.s32.totalorder %s23, 0
      %p85 = por %p83, %p84
      %p86 = scmp.ne.s32.totalorder %s78, %s80
      %p87 = scmp.eq.s32.totalorder %s28, 1
      %p88 = por %p86, %p87
      %p89 = scmp.ne.s32.totalorder %s80, %s81
      %p90 = scmp.eq.s32.totalorder %s28, 0
      %p91 = por %p89, %p90
      %p92 = scmp.ne.s32.totalorder %s80, %s81
      %p93 = scmp.eq.s32.totalorder %s29, 1
      %p94 = por %p92, %p93
      %p96 = scmp.ne.s32.totalorder %s81, %s95
      %p97 = scmp.eq.s32.totalorder %s29, 0
      %p98 = por %p96, %p97
      %s100 = sadd.s32 %s99, 1
      %p103 = scmp.eq.s32.totalorder %s23, 1
      %p104 = scmp.ne.s32.totalorder %s99, %s101
      %p105 = scmp.eq.s32.totalorder %s23, 0
      %p106 = por %p104, %p105
      %p107 = scmp.ne.s32.totalorder %s99, %s101
      %p108 = scmp.eq.s32.totalorder %s28, 1
      %p109 = por %p107, %p108
      %p110 = scmp.ne.s32.totalorder %s101, %s102
      %p111 = scmp.eq.s32.totalorder %s28, 0
      %p112 = por %p110, %p111
      %p113 = scmp.ne.s32.totalorder %s101, %s102
      %p114 = scmp.eq.s32.totalorder %s29, 1
      %p115 = por %p113, %p114
      %p117 = scmp.ne.s32.totalorder %s102, %s116
      %p118 = scmp.eq.s32.totalorder %s29, 0
      %p119 = por %p117, %p118
      %s120 = ssub.s32 %s23, %s30
      %p121 = scmp.eq.s32.totalorder %s120, 0
      %s123 = sadd.s32 %s122, 1
      %s124 = scalar_select %p121, %s122, %s123
      %p127 = pneg %p121
      %p128 = scmp.eq.s32.totalorder %s23, 1
      %p129 = por %p127, %p128
      %p130 = scmp.ne.s32.totalorder %s122, %s125
      %p131 = scmp.eq.s32.totalorder %s23, 0
      %p132 = por %p130, %p131
      %p133 = scmp.ne.s32.totalorder %s122, %s125
      %p134 = scmp.eq.s32.totalorder %s28, 1
      %p135 = por %p133, %p134
      %p136 = scmp.ne.s32.totalorder %s125, %s126
      %p137 = scmp.eq.s32.totalorder %s28, 0
      %p138 = por %p136, %p137
      %p139 = scmp.ne.s32.totalorder %s125, %s126
      %p140 = scmp.eq.s32.totalorder %s29, 1
      %p141 = por %p139, %p140
      %p143 = scmp.ne.s32.totalorder %s126, %s142
      %p144 = scmp.eq.s32.totalorder %s29, 0
      %p145 = por %p143, %p144
      %s146 = ssub.s32 %s23, %s30
      %p147 = scmp.eq.s32.totalorder %s146, 0
      %s149 = sadd.s32 %s148, 1
      %s150 = scalar_select %p147, %s148, %s149
      %p153 = pneg %p147
      %p154 = scmp.eq.s32.totalorder %s23, 1
      %p155 = por %p153, %p154
      %p156 = scmp.ne.s32.totalorder %s148, %s151
      %p157 = scmp.eq.s32.totalorder %s23, 0
      %p158 = por %p156, %p157
      %p159 = scmp.ne.s32.totalorder %s148, %s151
      %p160 = scmp.eq.s32.totalorder %s28, 1
      %p161 = por %p159, %p160
      %p162 = scmp.ne.s32.totalorder %s151, %s152
      %p163 = scmp.eq.s32.totalorder %s28, 0
      %p164 = por %p162, %p163
      %p165 = scmp.ne.s32.totalorder %s151, %s152
      %p166 = scmp.eq.s32.totalorder %s29, 1
      %p167 = por %p165, %p166
      %p169 = scmp.ne.s32.totalorder %s152, %s168
      %p170 = scmp.eq.s32.totalorder %s29, 0
      %p171 = por %p169, %p170
      %s172 = ssub.s32 %s23, %s30
      %p173 = scmp.eq.s32.totalorder %s172, 0
      %s175 = sadd.s32 %s174, 1
      %s176 = scalar_select %p173, %s174, %s175
      %p179 = pneg %p173
      %p180 = scmp.eq.s32.totalorder %s23, 1
      %p181 = por %p179, %p180
      %p182 = scmp.ne.s32.totalorder %s174, %s177
      %p183 = scmp.eq.s32.totalorder %s23, 0
      %p184 = por %p182, %p183
      %p185 = scmp.ne.s32.totalorder %s174, %s177
      %p186 = scmp.eq.s32.totalorder %s28, 1
      %p187 = por %p185, %p186
      %p188 = scmp.ne.s32.totalorder %s177, %s178
      %p189 = scmp.eq.s32.totalorder %s28, 0
      %p190 = por %p188, %p189
      %p191 = scmp.ne.s32.totalorder %s177, %s178
      %p192 = scmp.eq.s32.totalorder %s29, 1
      %p193 = por %p191, %p192
      %p195 = scmp.ne.s32.totalorder %s178, %s194
      %p196 = scmp.eq.s32.totalorder %s29, 0
      %p197 = por %p195, %p196
      %p198 = scmp.le.s32.totalorder 1, %s23
      %p199 = scmp.lt.s32.totalorder %s23, 3
      %p200 = pnand %p198, %p199
      %p201 = pneg %p200
      // Predicated region
      $region9: #{tpu_custom_call.1} parent=5 // pred_check
        _
      $region10: #{tpu_custom_call.1} parent=5 // pred_check_branch
        %203 = sbr.rel (%p200) target = $region12
      $region11: #{tpu_custom_call.1} parent=5 // pred_region
        %s204 = ssub.s32 %s23, 1
        // Predicated region
        $region13: #{tpu_custom_call.1} parent=11 // pred_check
          %p205 = pneg %p70
        $region14: #{tpu_custom_call.1} parent=11 // pred_check_branch
          %207 = sbr.rel (%p205) target = $region16
        $region15: #{tpu_custom_call.1} parent=11 // pred_region
          _
        $region16: #{tpu_custom_call.1} parent=11 // pred_fallthru
          _
        // Predicated region
        $region17: #{tpu_custom_call.1} parent=11 // pred_check
          %p208 = pneg %p91
        $region18: #{tpu_custom_call.1} parent=11 // pred_check_branch
          %210 = sbr.rel (%p208) target = $region20
        $region19: #{tpu_custom_call.1} parent=11 // pred_region
          _
        $region20: #{tpu_custom_call.1} parent=11 // pred_fallthru
          _
        // Predicated region
        $region21: #{tpu_custom_call.1} parent=11 // pred_check
          %p211 = pneg %p112
        $region22: #{tpu_custom_call.1} parent=11 // pred_check_branch
          %213 = sbr.rel (%p211) target = $region24
        $region23: #{tpu_custom_call.1} parent=11 // pred_region
          %s215 = ssub.s32 1024, 1024
          %216 = vsyncadd [#allocation6], %s215
          %s217 = sshll.u32 [#allocation5], 4
          %s218 = int_to_ptr.vmem [resolvable:$true] %s217
          %223 = dma.hbm_to_vmem [thread:$0]  %s3, 1024, %s218, [#allocation6], 64, 64, 4
        $region24: #{tpu_custom_call.1} parent=11 // pred_fallthru
          _
      $region12: #{tpu_custom_call.1} parent=5 // pred_fallthru
        _
      %p224 = scmp.lt.s32.totalorder %s23, 2
      // Predicated region
      $region25: #{tpu_custom_call.1} parent=5 // pred_check
        %p225 = pneg %p224
      $region26: #{tpu_custom_call.1} parent=5 // pred_check_branch
        %227 = sbr.rel (%p225) target = $region28
      $region27: #{tpu_custom_call.1} parent=5 // pred_region
        // Predicated region
        $region29: #{tpu_custom_call.1} parent=27 // pred_check
          %p228 = pneg %p43
        $region30: #{tpu_custom_call.1} parent=27 // pred_check_branch
          %230 = sbr.rel (%p228) target = $region32
        $region31: #{tpu_custom_call.1} parent=27 // pred_region
          %s231 = sand.u32 %s33, 1
          %s232 = scalar_lea.sflag [#allocation3], %s231
          %s233 = sand.u32 %s33, 1
          %s234 = smul.addr %s233, 64
          %s235 = scalar_lea.vmem [#allocation2], %s234
          %s236 = smul.u32 8, %s23
          %s238 = ssub.s32 1024, 1024
          %239 = vsyncadd %s232, %s238
          %s240 = smul.addr %s236, 128
          %s241 = scalar_lea.hbm %s0, %s240
          %s242 = sshll.u32 %s235, 4
          %s243 = int_to_ptr.vmem [resolvable:$true] %s242
          %248 = dma.hbm_to_vmem [thread:$0]  %s241, 1024, %s243, %s232, 128, 128, 8
        $region32: #{tpu_custom_call.1} parent=27 // pred_fallthru
          _
      $region28: #{tpu_custom_call.1} parent=5 // pred_fallthru
        _
      %p249 = scmp.le.s32.totalorder 1, %s23
      %p250 = scmp.lt.s32.totalorder %s23, 3
      %p251 = pnand %p249, %p250
      %p252 = pneg %p251
      // Predicated region
      $region33: #{tpu_custom_call.1} parent=5 // pred_check
        _
      $region34: #{tpu_custom_call.1} parent=5 // pred_check_branch
        %254 = sbr.rel (%p251) target = $region36
      $region35: #{tpu_custom_call.1} parent=5 // pred_region
        %s255 = ssub.s32 %s23, 1
        %s256 = sand.u32 %s36, 1
        %s257 = scalar_lea.sflag [#allocation3], %s256
        %s258 = sand.u32 %s36, 1
        %s259 = smul.addr %s258, 64
        %s260 = scalar_lea.vmem [#allocation2], %s259
        // Predicated region
        $region37: #{tpu_custom_call.1} parent=35 // pred_check
          %p261 = pneg %p49
        $region38: #{tpu_custom_call.1} parent=35 // pred_check_branch
          %263 = sbr.rel (%p261) target = $region40
        $region39: #{tpu_custom_call.1} parent=35 // pred_region
          %264 = dma.done %s257, 1024
        $region40: #{tpu_custom_call.1} parent=35 // pred_fallthru
          _
        // Predicated region
        $region41: #{tpu_custom_call.1} parent=35 // pred_check
          %p265 = pneg %p112
        $region42: #{tpu_custom_call.1} parent=35 // pred_check_branch
          %267 = sbr.rel (%p265) target = $region44
        $region43: #{tpu_custom_call.1} parent=35 // pred_region
          %268 = dma.done [#allocation6], 1024
        $region44: #{tpu_custom_call.1} parent=35 // pred_fallthru
          _
        %s269 = sand.u32 %s36, 1
        %s270 = scalar_lea.sflag [#allocation3], %s269
        %s271 = sand.u32 %s36, 1
        %s272 = smul.addr %s271, 64
        %s273 = scalar_lea.vmem [#allocation2], %s272
        %p274 = pneg %p49
        %p275 = pneg %p46
        %p276 = pneg %p70
        %p277 = pneg %p67
        %p278 = pneg %p91
        %p279 = pneg %p88
        %p280 = pneg %p112
        %p281 = pneg %p109
        %p282 = pneg %p138
        %p283 = pneg %p135
        %s284 = sand.u32 %s125, 1
        %s285 = scalar_lea.sflag [#allocation4], %s284
        %s286 = sand.u32 %s125, 1
        %s287 = smul.addr %s286, 32
        %s288 = scalar_lea.vmem [#allocation7], %s287
        %p289 = pneg %p164
        %p290 = pneg %p161
        %s291 = sand.u32 %s28, 1
        %s292 = scalar_lea.sflag [#allocation9], %s291
        %s293 = sand.u32 %s151, 1
        %s294 = scalar_lea.vmem [#allocation8], %s293
        %p295 = pneg %p190
        %p296 = pneg %p187
        %s297 = sand.u32 %s28, 1
        %s298 = scalar_lea.sflag [#allocation9], %s297
        %s299 = sand.u32 %s177, 1
        %s300 = scalar_lea.vmem [#allocation10], %s299
        %s301 = smul.u32 8, %s28
        %s302 = smul.u32 8, %s28
        %v304 = vld [vmem:[%s260] sm:$0xff]
        %v305 = vld [vmem:[%s260 + $0x8] sm:$0xff]
        %v306 = vld [vmem:[%s260 + $0x10] sm:$0xff]
        %v307 = vld [vmem:[%s260 + $0x18] sm:$0xff]
        %v308 = vld [vmem:[%s260 + $0x20] sm:$0xff]
        %v309 = vld [vmem:[%s260 + $0x28] sm:$0xff]
        %v310 = vld [vmem:[%s260 + $0x30] sm:$0xff]
        %v311 = vld [vmem:[%s260 + $0x38] sm:$0xff]
        %v312 = vpack.c.bf16 %v305, %v304
        %v313 = vpack.c.bf16 %v307, %v306
        %v314 = vpack.c.bf16 %v309, %v308
        %v315 = vpack.c.bf16 %v311, %v310
        %v316 = vld [vmem:[#allocation5] sm:$0xf]
        %v317 = vld [vmem:[#allocation5 + $0x4] sm:$0xf]
        %v318 = vld [vmem:[#allocation5 + $0x8] sm:$0xf]
        %v319 = vld [vmem:[#allocation5 + $0xc] sm:$0xf]
        %v320 = vld [vmem:[#allocation5 + $0x10] sm:$0xf]
        %v321 = vld [vmem:[#allocation5 + $0x14] sm:$0xf]
        %v322 = vld [vmem:[#allocation5 + $0x18] sm:$0xf]
        %v323 = vld [vmem:[#allocation5 + $0x1c] sm:$0xf]
        %v324 = vld [vmem:[#allocation5 + $0x20] sm:$0xf]
        %v325 = vld [vmem:[#allocation5 + $0x24] sm:$0xf]
        %v326 = vld [vmem:[#allocation5 + $0x28] sm:$0xf]
        %v327 = vld [vmem:[#allocation5 + $0x2c] sm:$0xf]
        %v328 = vld [vmem:[#allocation5 + $0x30] sm:$0xf]
        %v329 = vld [vmem:[#allocation5 + $0x34] sm:$0xf]
        %v330 = vld [vmem:[#allocation5 + $0x38] sm:$0xf]
        %v331 = vld [vmem:[#allocation5 + $0x3c] sm:$0xf]
        %v348 = vunpack.c.l.b16 %v316
        %v349 = vunpack.c.l.b16 %v317
        %v350 = vunpack.c.l.b16 %v318
        %v351 = vunpack.c.l.b16 %v319
        %v352 = vunpack.c.l.b16 %v320
        %v353 = vunpack.c.l.b16 %v321
        %v354 = vunpack.c.l.b16 %v322
        %v355 = vunpack.c.l.b16 %v323
        %v356 = vunpack.c.l.b16 %v324
        %v357 = vunpack.c.l.b16 %v325
        %v358 = vunpack.c.l.b16 %v326
        %v359 = vunpack.c.l.b16 %v327
        %v360 = vunpack.c.l.b16 %v328
        %v361 = vunpack.c.l.b16 %v329
        %v362 = vunpack.c.l.b16 %v330
        %v363 = vunpack.c.l.b16 %v331
        %v364 = vpack.c.b16 %v349, %v348
        %v365 = vpack.c.b16 %v351, %v350
        %v366 = vpack.c.b16 %v353, %v352
        %v367 = vpack.c.b16 %v355, %v354
        %v368 = vpack.c.b16 %v357, %v356
        %v369 = vpack.c.b16 %v359, %v358
        %v370 = vpack.c.b16 %v361, %v360
        %v371 = vpack.c.b16 %v363, %v362
        %380 = vmatprep.subr.bf16.mxu0 0
        %381 = vmatpush1.bf16.msra.mxu0 %v371
        %382 = vmatprep.subr.bf16.mxu0 0
        %383 = vmatpush1.bf16.msra.mxu0 %v370
        %384 = vmatprep.subr.bf16.mxu0 0
        %385 = vmatpush1.bf16.msra.mxu0 %v369
        %386 = vmatprep.subr.bf16.mxu0 0
        %387 = vmatpush1.bf16.msra.mxu0 %v368
        %388 = vmatprep.subr.bf16.mxu0 0
        %389 = vmatpush1.bf16.msra.mxu0 %v367
        %390 = vmatprep.subr.bf16.mxu0 0
        %391 = vmatpush1.bf16.msra.mxu0 %v366
        %392 = vmatprep.subr.bf16.mxu0 0
        %393 = vmatpush1.bf16.msra.mxu0 %v365
        %394 = vmatprep.subr.bf16.mxu0 0
        %395 = vmatpush1.bf16.msra.mxu0 %v364
        %396 = vmatprep.subr.bf16.mxu0 0
        %397 = vmatpush2.bf16.msra.mxu0 0
        %398 = vmatprep.subr.bf16.mxu0 0
        %399 = vmatpush2.bf16.msra.mxu0 0
        %400 = vmatprep.subr.bf16.mxu0 0
        %401 = vmatpush2.bf16.msra.mxu0 0
        %402 = vmatprep.subr.bf16.mxu0 0
        %403 = vmatpush2.bf16.msra.mxu0 0
        %404 = vmatprep.subr.bf16.mxu0 0
        %405 = vmatpush2.bf16.msra.mxu0 0
        %406 = vmatprep.subr.bf16.mxu0 0
        %407 = vmatpush2.bf16.msra.mxu0 0
        %408 = vmatprep.subr.bf16.mxu0 0
        %409 = vmatpush2.bf16.msra.mxu0 0
        %410 = vmatprep.subr.bf16.mxu0 0
        %411 = vmatpush2.bf16.msra.mxu0 0
        %412 = vmatprep.mubr.bf16.mxu0 0
        %413 = vmatmul.mubr.bf16.gmra.mxu0 %v312
        %v414 = vpop.f32.mrf.mxu0
        %v415 = vadd.f32 0.0, %v414
        %v416 = vpop.f32.mrf.mxu0
        %v417 = vpop.f32.mrf.mxu0
        %v418 = vadd.f32 0.0, %v417
        %v419 = vpop.f32.mrf.mxu0
        %420 = vmatprep.mubr.bf16.mxu0 0
        %421 = vmatmul.mubr.bf16.gmra.mxu0 %v313
        %v422 = vpop.f32.mrf.mxu0
        %v423 = vadd.f32 0.0, %v422
        %v424 = vpop.f32.mrf.mxu0
        %v425 = vpop.f32.mrf.mxu0
        %v426 = vadd.f32 0.0, %v425
        %v427 = vpop.f32.mrf.mxu0
        %428 = vmatprep.mubr.bf16.mxu0 0
        %429 = vmatmul.mubr.bf16.gmra.mxu0 %v314
        %v430 = vpop.f32.mrf.mxu0
        %v431 = vadd.f32 0.0, %v430
        %v432 = vpop.f32.mrf.mxu0
        %v433 = vpop.f32.mrf.mxu0
        %v434 = vadd.f32 0.0, %v433
        %v435 = vpop.f32.mrf.mxu0
        %436 = vmatprep.mubr.bf16.mxu0 0
        %437 = vmatmul.mubr.bf16.gmra.mxu0 %v315
        %v438 = vpop.f32.mrf.mxu0
        %v439 = vadd.f32 0.0, %v438
        %v440 = vpop.f32.mrf.mxu0
        %v441 = vpop.f32.mrf.mxu0
        %v442 = vadd.f32 0.0, %v441
        %v443 = vpop.f32.mrf.mxu0
        %444 = vdwg.mxu0
        %v445 = vpack.c.bf16 %v418, %v415
        %v446 = vpack.c.bf16 %v426, %v423
        %v447 = vpack.c.bf16 %v434, %v431
        %v448 = vpack.c.bf16 %v442, %v439
        %v453 = vunpack.c.l.b16 %v445
        %v454 = vunpack.c.h.b16 %v445
        %v455 = vunpack.c.l.b16 %v446
        %v456 = vunpack.c.h.b16 %v446
        %v457 = vunpack.c.l.b16 %v447
        %v458 = vunpack.c.h.b16 %v447
        %v459 = vunpack.c.l.b16 %v448
        %v460 = vunpack.c.h.b16 %v448
        %v461 = vpack.c.b16 %v453, %v453
        %v462 = vpack.c.b16 %v454, %v454
        %v463 = vpack.c.b16 %v455, %v455
        %v464 = vpack.c.b16 %v456, %v456
        %v465 = vpack.c.b16 %v457, %v457
        %v466 = vpack.c.b16 %v458, %v458
        %v467 = vpack.c.b16 %v459, %v459
        %v468 = vpack.c.b16 %v460, %v460
        %477 = vst [vmem:[%s288] sm:$0xf] %v461
        %478 = vst [vmem:[%s288 + $0x4] sm:$0xf] %v462
        %479 = vst [vmem:[%s288 + $0x8] sm:$0xf] %v463
        %480 = vst [vmem:[%s288 + $0xc] sm:$0xf] %v464
        %481 = vst [vmem:[%s288 + $0x10] sm:$0xf] %v465
        %482 = vst [vmem:[%s288 + $0x14] sm:$0xf] %v466
        %483 = vst [vmem:[%s288 + $0x18] sm:$0xf] %v467
        %484 = vst [vmem:[%s288 + $0x1c] sm:$0xf] %v468
        %v485 = vunpack.c.l.bf16 %v445
        %v486 = vunpack.c.h.bf16 %v445
        %v487 = vunpack.c.l.bf16 %v446
        %v488 = vunpack.c.h.bf16 %v446
        %v489 = vunpack.c.l.bf16 %v447
        %v490 = vunpack.c.h.bf16 %v447
        %v491 = vunpack.c.l.bf16 %v448
        %v492 = vunpack.c.h.bf16 %v448
        %v493 = vadd.f32 %v485, %v486
        %v494 = vadd.f32 %v493, %v487
        %v495 = vadd.f32 %v494, %v488
        %v496 = vadd.f32 %v495, %v489
        %v497 = vadd.f32 %v496, %v490
        %v498 = vadd.f32 %v497, %v491
        %v499 = vadd.f32 %v498, %v492
        %v500 = vrot.slane %v499, 4
        %v501 = vadd.f32 %v499, %v500
        %v502 = vrot.slane %v501, 2
        %v503 = vadd.f32 %v501, %v502
        %v504 = vrot.slane %v503, 1
        %v505 = vadd.f32 %v503, %v504
        %506 = vst [vmem:[%s294] sm:$0x1] %v505
        %v507 = vmul.f32 %v485, %v485
        %v508 = vmul.f32 %v486, %v486
        %v509 = vmul.f32 %v487, %v487
        %v510 = vmul.f32 %v488, %v488
        %v511 = vmul.f32 %v489, %v489
        %v512 = vmul.f32 %v490, %v490
        %v513 = vmul.f32 %v491, %v491
        %v514 = vmul.f32 %v492, %v492
        %v515 = vadd.f32 %v507, %v508
        %v516 = vadd.f32 %v515, %v509
        %v517 = vadd.f32 %v516, %v510
        %v518 = vadd.f32 %v517, %v511
        %v519 = vadd.f32 %v518, %v512
        %v520 = vadd.f32 %v519, %v513
        %v521 = vadd.f32 %v520, %v514
        %v522 = vrot.slane %v521, 4
        %v523 = vadd.f32 %v521, %v522
        %v524 = vrot.slane %v523, 2
        %v525 = vadd.f32 %v523, %v524
        %v526 = vrot.slane %v525, 1
        %v527 = vadd.f32 %v525, %v526
        %528 = vst [vmem:[%s300] sm:$0x1] %v527
        %s529 = sand.u32 %s125, 1
        %s530 = scalar_lea.sflag [#allocation4], %s529
        %s531 = sand.u32 %s125, 1
        %s532 = smul.addr %s531, 32
        %s533 = scalar_lea.vmem [#allocation7], %s532
        %s534 = sand.u32 %s28, 1
        %s535 = scalar_lea.sflag [#allocation9], %s534
        %s536 = sand.u32 %s151, 1
        %s537 = scalar_lea.vmem [#allocation8], %s536
        %s538 = sand.u32 %s28, 1
        %s539 = scalar_lea.sflag [#allocation9], %s538
        %s540 = sand.u32 %s177, 1
        %s541 = scalar_lea.vmem [#allocation10], %s540
        // Predicated region
        $region45: #{tpu_custom_call.1} parent=35 // pred_check
          %p542 = pneg %p135
        $region46: #{tpu_custom_call.1} parent=35 // pred_check_branch
          %544 = sbr.rel (%p542) target = $region48
        $region47: #{tpu_custom_call.1} parent=35 // pred_region
          %s545 = smul.u32 8, %s28
          %s547 = ssub.s32 512, 512
          %548 = vsyncadd %s530, %s547
          %s549 = smul.addr %s545, 64
          %s550 = scalar_lea.hbm %s4, %s549
          %s551 = sshll.u32 %s533, 4
          %s552 = int_to_ptr.vmem [resolvable:$true] %s551
          %557 = dma.vmem_to_hbm [thread:$0]  %s552, 512, %s550, %s530, 64, 64, 4
        $region48: #{tpu_custom_call.1} parent=35 // pred_fallthru
          _
        // Predicated region
        $region49: #{tpu_custom_call.1} parent=35 // pred_check
          %p558 = pneg %p161
        $region50: #{tpu_custom_call.1} parent=35 // pred_check_branch
          %560 = sbr.rel (%p558) target = $region52
        $region51: #{tpu_custom_call.1} parent=35 // pred_region
          %s562 = ssub.s32 16, 16
          %563 = vsyncadd %s535, %s562
          %s564 = smul.addr %s28, 16
          %s565 = scalar_lea.hbm %s5, %s564
          %s567 = sshll.u32 %s537, 4
          %s568 = int_to_ptr.vmem [resolvable:$true] %s567
          %570 = dma.vmem_to_hbm [thread:$0]  %s568, 16, %s565, %s535
        $region52: #{tpu_custom_call.1} parent=35 // pred_fallthru
          _
        // Predicated region
        $region53: #{tpu_custom_call.1} parent=35 // pred_check
          %p571 = pneg %p187
        $region54: #{tpu_custom_call.1} parent=35 // pred_check_branch
          %573 = sbr.rel (%p571) target = $region56
        $region55: #{tpu_custom_call.1} parent=35 // pred_region
          %s575 = ssub.s32 16, 16
          %576 = vsyncadd %s539, %s575
          %s577 = smul.addr %s28, 16
          %s578 = scalar_lea.hbm %s6, %s577
          %s580 = sshll.u32 %s541, 4
          %s581 = int_to_ptr.vmem [resolvable:$true] %s580
          %583 = dma.vmem_to_hbm [thread:$0]  %s581, 16, %s578, %s539
        $region56: #{tpu_custom_call.1} parent=35 // pred_fallthru
          _
      $region36: #{tpu_custom_call.1} parent=5 // pred_fallthru
        _
      %p584 = scmp.le.s32.totalorder 2, %s23
      // Predicated region
      $region57: #{tpu_custom_call.1} parent=5 // pred_check
        %p585 = pneg %p584
      $region58: #{tpu_custom_call.1} parent=5 // pred_check_branch
        %587 = sbr.rel (%p585) target = $region60
      $region59: #{tpu_custom_call.1} parent=5 // pred_region
        %s588 = ssub.s32 %s23, 2
        // Predicated region
        $region61: #{tpu_custom_call.1} parent=59 // pred_check
          %p589 = pneg %p141
        $region62: #{tpu_custom_call.1} parent=59 // pred_check_branch
          %591 = sbr.rel (%p589) target = $region64
        $region63: #{tpu_custom_call.1} parent=59 // pred_region
          %s592 = sand.u32 %s126, 1
          %s593 = scalar_lea.sflag [#allocation4], %s592
          %s594 = sand.u32 %s126, 1
          %s595 = smul.addr %s594, 32
          %s596 = scalar_lea.vmem [#allocation7], %s595
          %597 = dma.done %s593, 512
        $region64: #{tpu_custom_call.1} parent=59 // pred_fallthru
          _
        // Predicated region
        $region65: #{tpu_custom_call.1} parent=59 // pred_check
          %p598 = pneg %p167
        $region66: #{tpu_custom_call.1} parent=59 // pred_check_branch
          %600 = sbr.rel (%p598) target = $region68
        $region67: #{tpu_custom_call.1} parent=59 // pred_region
          %s601 = sand.u32 %s29, 1
          %s602 = scalar_lea.sflag [#allocation9], %s601
          %s603 = sand.u32 %s152, 1
          %s604 = scalar_lea.vmem [#allocation8], %s603
          %605 = dma.done %s602, 16
        $region68: #{tpu_custom_call.1} parent=59 // pred_fallthru
          _
        // Predicated region
        $region69: #{tpu_custom_call.1} parent=59 // pred_check
          %p606 = pneg %p193
        $region70: #{tpu_custom_call.1} parent=59 // pred_check_branch
          %608 = sbr.rel (%p606) target = $region72
        $region71: #{tpu_custom_call.1} parent=59 // pred_region
          %s609 = sand.u32 %s29, 1
          %s610 = scalar_lea.sflag [#allocation9], %s609
          %s611 = sand.u32 %s178, 1
          %s612 = scalar_lea.vmem [#allocation10], %s611
          %613 = dma.done %s610, 16
        $region72: #{tpu_custom_call.1} parent=59 // pred_fallthru
          _
      $region60: #{tpu_custom_call.1} parent=5 // pred_fallthru
        _
    $region6: #{tpu_custom_call.1} parent=1 // loop_footer
      %s27 = sadd.s32 1, %s23
    $region7: #{tpu_custom_call.1} parent=1 // loop_footer_branch
      %22 = sbr.rel target = $region3
    $region8: #{tpu_custom_call.1} parent=1 // loop_exit
      _
    %614 = vsyncpa [#allocation3], 1
    %s615 = scalar_lea.sflag [#allocation3], 1
    %616 = vsyncpa %s615, 1
    %617 = vsyncpa [#allocation6], 1
    %618 = vsyncpa [#allocation4], 1
    %s619 = scalar_lea.sflag [#allocation4], 1
    %620 = vsyncpa %s619, 1
    %621 = vsyncpa [#allocation9], 1
    %s622 = scalar_lea.sflag [#allocation9], 1
    %623 = vsyncpa %s622, 1

</llo_original>
